<compile_context>
chip_gen: v5e
topology: v5e:2x2
jax: 0.10.0
libtpu: 0.0.40
codegen_flags: <defaults>
</compile_context>

<pallas_src>
import functools

import jax
import jax.numpy as jnp
from jax import lax
from jax.experimental import pallas as pl
from jax.experimental.pallas import tpu as pltpu

LANE = 128            # lane width of a vreg (last-dim tile)
SUBLANE = 8           # sublane tile (second-to-last dim)
MAX_BLOCK_R = 256     # max sublane rows per grid block -> 256*128*4 B = 128 KiB


def _rand_score_kernel(seed_ref, o_ref):
    """Fill o_ref (float32[block_rows, LANE]) with uniform [0,1) values.

    seed_ref: SMEM int32[1] -- base seed.
    The stream is a pure function of (seed, global element index), so every
    grid block produces an independent, reproducible slice of one stream.
    """
    blk = pl.program_id(0)
    r, c = o_ref.shape

    row = lax.broadcasted_iota(jnp.int32, (r, c), 0)
    col = lax.broadcasted_iota(jnp.int32, (r, c), 1)
    lin = blk * (r * c) + row * c + col                  # global element counter

    x = lin.astype(jnp.uint32)
    seed = seed_ref[0].astype(jnp.uint32)

    # Counter-based hash (murmur/xxhash-style finalizer) -> 32 uniform bits.
    x = x * jnp.uint32(0x9E3779B1) + seed
    x = x ^ (x >> 16)
    x = x * jnp.uint32(0x7FEB352D)
    x = x ^ (x >> 15)
    x = x * jnp.uint32(0x846CA68B)
    x = x ^ (x >> 16)

    # Exponent-bit trick: top 23 random bits as mantissa of 1.0f gives a float
    # in [1, 2); subtract 1.0 for [0, 1).  Avoids int->float convert + multiply.
    fbits = (x >> jnp.uint32(9)) | jnp.uint32(0x3F800000)
    o_ref[...] = lax.bitcast_convert_type(fbits, jnp.float32) - jnp.float32(1.0)


@functools.lru_cache(maxsize=None)
def _build_rand_fn(n_blocks: int, block_rows: int):
    """Jitted pallas_call producing a lane-dense (n_blocks*block_rows, 128) slab."""
    fn = pl.pallas_call(
        _rand_score_kernel,
        out_shape=jax.ShapeDtypeStruct((n_blocks * block_rows, LANE), jnp.float32),
        grid=(n_blocks,),
        in_specs=[pl.BlockSpec(memory_space=pltpu.SMEM)],
        out_specs=pl.BlockSpec((block_rows, LANE), lambda i: (i, 0)),
        compiler_params=pltpu.CompilerParams(
            dimension_semantics=("parallel",)),
    )
    return jax.jit(fn)


def pallas_rand_scores(num_rows: int, seed: int) -> jax.Array:
    """Uniform [0,1) scores, shape (num_rows, 1), computed by the Pallas kernel."""
    num_rows = max(1, int(num_rows))
    # Sublane rows needed when packing num_rows scalars 128-per-row.
    rows_needed = (num_rows + LANE - 1) // LANE
    # Adaptive block: small batches -> one small block; large -> 256-row tiles.
    block_rows = min(MAX_BLOCK_R,
                     ((rows_needed + SUBLANE - 1) // SUBLANE) * SUBLANE)
    n_blocks = (rows_needed + block_rows - 1) // block_rows

    fn = _build_rand_fn(n_blocks, block_rows)
    seed_arr = jnp.asarray([seed & 0x7FFFFFFF], dtype=jnp.int32)
    slab = fn(seed_arr)                       # (n_blocks*block_rows, 128) lane-dense
    flat = slab.reshape(-1)[:num_rows]        # contiguous slice, no strided gather
    return flat.reshape(num_rows, 1)


class Model:
    """JAX/Pallas port of the grading-script dummy Model."""

    def __init__(self, device="tpu"):
        self.device = device
        # The reference forward has no parameters.

    def forward(self, x):
        # Reference forward body is `pass` (returns None); nothing to compute.
        # TODO(synk): reference forward body is empty -- no hot path to port.
        return None

    def inference(self, PID, centroid, LIDs, ligands):
        """Returns a (len(LIDs), 1) float32 array of scores in [0,1),
        matching torch.rand(len(LIDs), 1) semantics (deterministic seed here)."""
        # Deterministic seed derived from the inputs (PID + ligand IDs).
        seed = sum(ord(c) for c in PID)
        for lid in LIDs:
            seed = (seed * 131 + sum(ord(c) for c in lid)) & 0x7FFFFFFF
        return pallas_rand_scores(len(LIDs), seed)


if __name__ == "__main__":
    key = jax.random.PRNGKey(0)
    _ = key  # inputs to `inference` are strings/tuples; PRNGKey kept for convention.

    PID = "112M"
    centroid = (34.8922, 7.174, 12.4984)
    LIDs = ["3", "3421", "77", "9001"]                       # batch size 4
    ligands = ["NCCCCCCNCCCCCCN", "C1CC1(N)P(=O)(O)O", "CCO", "c1ccccc1O"]

    model = Model(device="tpu")
    scores = model.inference(PID, centroid, LIDs, ligands)
    scores = jax.block_until_ready(scores)

    assert scores.shape == (len(LIDs), 1), scores.shape
    assert scores.dtype == jnp.float32
    assert bool(jnp.all(scores >= 0.0)) and bool(jnp.all(scores < 1.0))

    # Determinism check (same inputs -> same scores).
    scores2 = jax.block_until_ready(model.inference(PID, centroid, LIDs, ligands))
    assert bool(jnp.all(scores == scores2))

    # Larger batch exercises the multi-block grid path.
    big = jax.block_until_ready(pallas_rand_scores(70000, 12345))
    assert big.shape == (70000, 1)
    assert bool(jnp.all(big >= 0.0)) and bool(jnp.all(big < 1.0))

    print("KERNEL_OK")
</pallas_src>

<mosaic_0001>
module attributes {stable_mosaic.version = 11 : i64} {
  func.func @_rand_score_kernel(%arg0: i32, %arg1: memref<1xi32, #tpu.memory_space<smem>>, %arg2: memref<8x128xf32, #tpu.memory_space<vmem>>) attributes {dimension_semantics = [#tpu.dimension_semantics<parallel>], iteration_bounds = array<i64: 1>, scalar_prefetch = 0 : i64, scratch_operands = 0 : i64, tpu.core_type = #tpu.core_type<tc>, window_params = [{transform_indices = @transform_0, window_bounds = array<i64: 1>}, {transform_indices = @transform_1, window_bounds = array<i64: 8, 128>}]} {
    %0 = tpu.iota {dimensions = array<i32: 0>} : vector<8x128xi32>
    %1 = tpu.iota {dimensions = array<i32: 1>} : vector<8x128xi32>
    %c1024_i32 = arith.constant 1024 : i32
    %2 = arith.muli %arg0, %c1024_i32 : i32
    %c128_i32 = arith.constant 128 : i32
    %3 = vector.broadcast %c128_i32 : i32 to vector<8x128xi32>
    %4 = arith.muli %0, %3 : vector<8x128xi32>
    %5 = vector.broadcast %2 : i32 to vector<8x128xi32>
    %6 = arith.addi %5, %4 : vector<8x128xi32>
    %7 = arith.addi %6, %1 : vector<8x128xi32>
    %c0 = arith.constant 0 : index
    %8 = memref.load %arg1[%c0] : memref<1xi32, #tpu.memory_space<smem>>
    %c-1640531535_i32 = arith.constant -1640531535 : i32
    %9 = vector.broadcast %c-1640531535_i32 : i32 to vector<8x128xi32>
    %10 = arith.muli %7, %9 : vector<8x128xi32>
    %11 = vector.broadcast %8 : i32 to vector<8x128xi32>
    %12 = arith.addi %10, %11 : vector<8x128xi32>
    %c16_i32 = arith.constant 16 : i32
    %13 = vector.broadcast %c16_i32 : i32 to vector<8x128xi32>
    %14 = arith.shrui %12, %13 : vector<8x128xi32>
    %15 = arith.xori %12, %14 : vector<8x128xi32>
    %c2146121005_i32 = arith.constant 2146121005 : i32
    %16 = vector.broadcast %c2146121005_i32 : i32 to vector<8x128xi32>
    %17 = arith.muli %15, %16 : vector<8x128xi32>
    %c15_i32 = arith.constant 15 : i32
    %18 = vector.broadcast %c15_i32 : i32 to vector<8x128xi32>
    %19 = arith.shrui %17, %18 : vector<8x128xi32>
    %20 = arith.xori %17, %19 : vector<8x128xi32>
    %c-2073254261_i32 = arith.constant -2073254261 : i32
    %21 = vector.broadcast %c-2073254261_i32 : i32 to vector<8x128xi32>
    %22 = arith.muli %20, %21 : vector<8x128xi32>
    %c16_i32_0 = arith.constant 16 : i32
    %23 = vector.broadcast %c16_i32_0 : i32 to vector<8x128xi32>
    %24 = arith.shrui %22, %23 : vector<8x128xi32>
    %25 = arith.xori %22, %24 : vector<8x128xi32>
    %c9_i32 = arith.constant 9 : i32
    %26 = vector.broadcast %c9_i32 : i32 to vector<8x128xi32>
    %27 = arith.shrui %25, %26 : vector<8x128xi32>
    %c1065353216_i32 = arith.constant 1065353216 : i32
    %28 = vector.broadcast %c1065353216_i32 : i32 to vector<8x128xi32>
    %29 = arith.ori %27, %28 : vector<8x128xi32>
    %30 = tpu.bitcast %29 : vector<8x128xi32> -> vector<8x128xf32>
    %cst = arith.constant 1.000000e+00 : f32
    %31 = vector.broadcast %cst : f32 to vector<8x128xf32>
    %32 = arith.subf %30, %31 : vector<8x128xf32>
    %c0_1 = arith.constant 0 : index
    %c0_2 = arith.constant 0 : index
    %33 = vector.load %arg2[%c0_1, %c0_2] : memref<8x128xf32, #tpu.memory_space<vmem>>, vector<8x128xf32>
    tpu.vector_store %arg2[%c0_1, %c0_2], %32 {strides = array<i32>} : memref<8x128xf32, #tpu.memory_space<vmem>>, vector<8x128xf32>,
    return
  }
  func.func @transform_0(%arg0: i32) -> i32 {
    %c0_i32 = arith.constant 0 : i32
    %c0_i32_0 = arith.constant 0 : i32
    return %c0_i32 : i32
  }
  func.func @transform_1(%arg0: i32) -> (i32, i32) {
    %c0_i32 = arith.constant 0 : i32
    %c0_i32_0 = arith.constant 0 : i32
    return %arg0, %c0_i32 : i32, i32
  }
}

</mosaic_0001>

<llo_original>
// kernel: tpu_custom_call.1
$region0: #{tpu_custom_call.1}
  #allocation0 [shape = 'u32[]', space=smem, size = 0x4, offset = 0x4, fixed_abs, tag = 'smem constant byte address 0x4 - core index']
  #allocation1 [shape = 'u32[72,128]{1,0:T(1,128)}', space=vmem, size = 0x9000, scoped, tag = 'internal scratch']
  #allocation2 [shape = 's32[1]{0:T(128)S(6)}', space=smem, size = 0x200, scoped, tag = 'scoped memory for tpu_custom_call.1']
  %s0 = inlined_call_operand.<no memory space> [shape: s32[1], index: 0, kind: input, shape index: {}]
  %s1 = inlined_call_operand.hbm [shape: f32[8,128], index: 1, kind: output, shape index: {}]
  %s2 = sld [smem:[#allocation0]]
  $region14: #{tpu_custom_call.1} parent=0
    _
  %s4 = ssub.s32 1, %s2
  %s5 = scalar_select 0, %s4, %s2
  %6 = sst [smem:[#allocation2]] %s0
  $region1: #{tpu_custom_call.1} parent=0
    #allocation3 [shape = 'u8[4096]{0}', space=vmem, size = 0x1000, scoped, tag = 'output window, operand 0, single buffered']
    #allocation4 [shape = 's32[1]{0}', space=sflag, size = 0x4, scoped, tag = 'scoped memory for tpu_custom_call.1']
    %7 = vsyncpa [#allocation4], 0
    // Predicated region
    $region2: #{tpu_custom_call.1} parent=1 // pred_check
      _
    $region3: #{tpu_custom_call.1} parent=1 // pred_check_branch
      %9 = sbr.rel (0) target = $region5
    $region4: #{tpu_custom_call.1} parent=1 // pred_region
      _
    $region5: #{tpu_custom_call.1} parent=1 // pred_fallthru
      _
    %v10 = vlaneseq
    %v11 = vshrl.u32 %v10, 7
    %v12 = vlaneseq
    %v13 = vand.u32 %v12, 127
    %s14 = smul.u32 0, 1024
    %v15 = vmul.u32 %v11, 128
    %v16 = vstv %s14
    %v17 = vadd.s32 %v16, %v15
    %v18 = vadd.s32 %v17, %v13
    %s19 = sld [smem:[#allocation2]]
    %v20 = vmul.u32 %v18, 2654435761
    %v21 = vstv %s19
    %v22 = vadd.s32 %v20, %v21
    %v23 = vshrl.u32 %v22, 16
    %v24 = vxor.u32 %v22, %v23
    %v25 = vmul.u32 %v24, 2146121005
    %v26 = vshrl.u32 %v25, 15
    %v27 = vxor.u32 %v25, %v26
    %v28 = vmul.u32 %v27, 2221713035
    %v29 = vshrl.u32 %v28, 16
    %v30 = vxor.u32 %v28, %v29
    %v31 = vshrl.u32 %v30, 9
    %v32 = vor.u32 %v31, 1065353216
    %v34 = vsub.f32 %v32, 1.0
    %35 = vst [vmem:[#allocation3] sm:$0xff] %v34
    // Predicated region
    $region6: #{tpu_custom_call.1} parent=1 // pred_check
      _
    $region7: #{tpu_custom_call.1} parent=1 // pred_check_branch
      %37 = sbr.rel (0) target = $region9
    $region8: #{tpu_custom_call.1} parent=1 // pred_region
      %39 = vsyncadd [#allocation4], 0
      %s41 = sshll.u32 [#allocation3], 4
      %s42 = int_to_ptr.vmem [resolvable:$true] %s41
      %s43 = sshll.u32 %s1, 4
      %s44 = int_to_ptr.hbm [resolvable:$true] %s43
      %46 = dma.vmem_to_hbm [thread:$0]  %s42, 128, %s44, [#allocation4]
    $region9: #{tpu_custom_call.1} parent=1 // pred_fallthru
      _
    // Predicated region
    $region10: #{tpu_custom_call.1} parent=1 // pred_check
      _
    $region11: #{tpu_custom_call.1} parent=1 // pred_check_branch
      %48 = sbr.rel (0) target = $region13
    $region12: #{tpu_custom_call.1} parent=1 // pred_region
      %50 = dma.done [#allocation4], 128
    $region13: #{tpu_custom_call.1} parent=1 // pred_fallthru
      _
    %51 = vsyncpa [#allocation4], 1

</llo_original>
